<compile_context>
chip_gen: v7x
topology: tpu7x:2x2x1
jax: 0.10.0
libtpu: 0.0.40
codegen_flags: <defaults>
</compile_context>

<pallas_src>
import jax
import jax.numpy as jnp
from jax.experimental import pallas as pl
from jax.experimental.pallas import tpu as pltpu


def _round_up(a: int, m: int) -> int:
    return ((a + m - 1) // m) * m


def _make_tv_kernel(W: int, HW: int):
    def kernel(x_ref, wm_ref, htv_ref, wtv_ref):
        i = pl.program_id(1)  # reduction ("arbitrary") axis

        @pl.when(i == 0)
        def _init():
            htv_ref[...] = jnp.zeros_like(htv_ref)
            wtv_ref[...] = jnp.zeros_like(wtv_ref)

        x = x_ref[...].astype(jnp.float32)          # (P, H*W), lane-dense

        # Vertical neighbours: flat index j and j+W are (h, w) and (h+1, w).
        # Every produced entry is a valid diff -> no mask needed.
        dh = x[:, W:] - x[:, : HW - W]              # (P, (H-1)*W)

        # Horizontal neighbours: j and j+1; invalid where j is the last column
        # of a row (j % W == W-1) -> zeroed by the precomputed seam mask.
        dw = x[:, 1:] - x[:, : HW - 1]              # (P, H*W - 1)
        wmask = wm_ref[...][:, : HW - 1]            # (1, H*W - 1)

        htv_ref[...] += jnp.sum(dh * dh).reshape(1, 1, 1)
        wtv_ref[...] += jnp.sum(dw * dw * wmask).reshape(1, 1, 1)

    return kernel


def tv_loss(x, tv_weight: float = 1.0):
    """Pallas TPU implementation of TVLoss.forward for NCHW input x."""
    B, C, H, W = x.shape
    HW = H * W
    N = B * C

    # Lane-dense view: one plane per row (contiguous, so this reshape is free).
    x_planes = x.reshape(N, HW)

    # Seam mask for the horizontal-diff path: 0 where flat index j is the last
    # column of a row (x[j+1] belongs to the next row), else 1.
    wmask = (jnp.arange(HW, dtype=jnp.int32) % W != W - 1)
    wmask = wmask.astype(jnp.float32).reshape(1, HW)

    # ---- block sizing -------------------------------------------------------
    itemsize = jnp.dtype(x.dtype).itemsize
    plane_bytes = HW * itemsize
    target_block_bytes = 4 * 1024 * 1024            # ~4 MiB blocks ~ HBM roofline
    P = max(1, target_block_bytes // plane_bytes)   # planes per block
    P = min(P, pl.cdiv(N, 2))                       # don't over-pad tiny inputs
    P = _round_up(P, 8)                             # sublane (8) tiling constraint

    n_cores = 2                                     # leading "parallel" axis (v7x megacore)
    n_inner = pl.cdiv(N, n_cores * P)
    n_pad = n_cores * n_inner * P
    if n_pad != N:
        # Zero planes contribute exactly 0 to both diff sums.
        x_planes = jnp.pad(x_planes, ((0, n_pad - N), (0, 0)))

    compiler_kwargs = dict(dimension_semantics=("parallel", "arbitrary"))
    vmem_need = 2 * P * plane_bytes + (2 << 20)     # double-buffered input + slack
    if vmem_need > 30 * 1024 * 1024:
        # Only override the default scoped-VMEM limit when a single plane is so
        # large that the minimum 8-plane block no longer fits the defaults.
        compiler_kwargs["vmem_limit_bytes"] = int(vmem_need)

    kernel = _make_tv_kernel(W, HW)

    h_parts, w_parts = pl.pallas_call(
        kernel,
        out_shape=(
            jax.ShapeDtypeStruct((n_cores, 1, 1), jnp.float32),
            jax.ShapeDtypeStruct((n_cores, 1, 1), jnp.float32),
        ),
        grid_spec=pl.GridSpec(
            grid=(n_cores, n_inner),
            in_specs=[
                pl.BlockSpec((P, HW), lambda c, i: (c * n_inner + i, 0)),
                pl.BlockSpec((1, HW), lambda c, i: (0, 0)),   # constant mask block
            ],
            out_specs=(
                pl.BlockSpec((1, 1, 1), lambda c, i: (c, 0, 0)),
                pl.BlockSpec((1, 1, 1), lambda c, i: (c, 0, 0)),
            ),
        ),
        compiler_params=pltpu.CompilerParams(**compiler_kwargs),
    )(x_planes, wmask)

    h_tv = jnp.sum(h_parts)   # sum per-core partial accumulators
    w_tv = jnp.sum(w_parts)

    # Static counts, exactly as in the PyTorch module.
    count_h = C * (H - 1) * W
    count_w = C * H * (W - 1)
    return tv_weight * 2.0 * (h_tv / count_h + w_tv / count_w) / B


def _tv_loss_ref(x, tv_weight: float = 1.0):
    """Pure-JAX reference matching the PyTorch forward."""
    B, C, H, W = x.shape
    count_h = C * (H - 1) * W
    count_w = C * H * (W - 1)
    xf = x.astype(jnp.float32)
    h_tv = jnp.sum((xf[:, :, 1:, :] - xf[:, :, : H - 1, :]) ** 2)
    w_tv = jnp.sum((xf[:, :, :, 1:] - xf[:, :, :, : W - 1]) ** 2)
    return tv_weight * 2.0 * (h_tv / count_h + w_tv / count_w) / B


if __name__ == "__main__":
    key = jax.random.PRNGKey(0)
    B, C, H, W = 2, 4, 16, 16
    x = jax.random.normal(key, (B, C, H, W), dtype=jnp.float32)

    out = tv_loss(x, tv_weight=1.0)
    out = jax.block_until_ready(out)

    ref = jax.block_until_ready(_tv_loss_ref(x, tv_weight=1.0))
    assert jnp.allclose(out, ref, rtol=1e-5, atol=1e-5), (out, ref)

    print("KERNEL_OK")
</pallas_src>

<mosaic_0001>
module attributes {stable_mosaic.version = 11 : i64} {
  func.func @kernel(%arg0: i32, %arg1: i32, %arg2: memref<8x256xf32, #tpu.memory_space<vmem>>, %arg3: memref<1x256xf32, #tpu.memory_space<vmem>>, %arg4: memref<1x1x1xf32, #tpu.memory_space<vmem>>, %arg5: memref<1x1x1xf32, #tpu.memory_space<vmem>>) attributes {dimension_semantics = [#tpu.dimension_semantics<parallel>, #tpu.dimension_semantics<arbitrary>], iteration_bounds = array<i64: 2, 1>, scalar_prefetch = 0 : i64, scratch_operands = 0 : i64, tpu.core_type = #tpu.core_type<tc>, window_params = [{transform_indices = @transform_0, window_bounds = array<i64: 8, 256>}, {pipeline_mode = #tpu.pipeline_mode<synchronous>, transform_indices = @transform_1, window_bounds = array<i64: 1, 256>}, {transform_indices = @transform_2, window_bounds = array<i64: 1, 1, 1>}, {transform_indices = @transform_3, window_bounds = array<i64: 1, 1, 1>}]} {
    %c0_i32 = arith.constant 0 : i32
    %0 = arith.cmpi eq, %arg1, %c0_i32 : i32
    %1 = arith.extui %0 : i1 to i32
    %c0_i32_0 = arith.constant 0 : i32
    %2 = arith.cmpi ne, %1, %c0_i32_0 : i32
    scf.if %2 {
      %cst_17 = arith.constant 0.000000e+00 : f32
      %32 = vector.broadcast %cst_17 : f32 to vector<1x1x1xf32>
      %c0_18 = arith.constant 0 : index
      %c0_19 = arith.constant 0 : index
      %c0_20 = arith.constant 0 : index
      %33 = vector.load %arg4[%c0_18, %c0_19, %c0_20] : memref<1x1x1xf32, #tpu.memory_space<vmem>>, vector<1x1x1xf32>
      tpu.vector_store %arg4[%c0_18, %c0_19, %c0_20], %32 {strides = array<i32>} : memref<1x1x1xf32, #tpu.memory_space<vmem>>, vector<1x1x1xf32>,
      %cst_21 = arith.constant 0.000000e+00 : f32
      %34 = vector.broadcast %cst_21 : f32 to vector<1x1x1xf32>
      %c0_22 = arith.constant 0 : index
      %c0_23 = arith.constant 0 : index
      %c0_24 = arith.constant 0 : index
      %35 = vector.load %arg5[%c0_22, %c0_23, %c0_24] : memref<1x1x1xf32, #tpu.memory_space<vmem>>, vector<1x1x1xf32>
      tpu.vector_store %arg5[%c0_22, %c0_23, %c0_24], %34 {strides = array<i32>} : memref<1x1x1xf32, #tpu.memory_space<vmem>>, vector<1x1x1xf32>,
    } else {
    }
    %c0 = arith.constant 0 : index
    %c0_1 = arith.constant 0 : index
    %3 = vector.load %arg2[%c0, %c0_1] : memref<8x256xf32, #tpu.memory_space<vmem>>, vector<8x256xf32>
    %4 = vector.extract_strided_slice %3 {offsets = [0, 16], sizes = [8, 240], strides = [1, 1]} : vector<8x256xf32> to vector<8x240xf32>
    %5 = vector.extract_strided_slice %3 {offsets = [0, 0], sizes = [8, 240], strides = [1, 1]} : vector<8x256xf32> to vector<8x240xf32>
    %6 = arith.subf %4, %5 : vector<8x240xf32>
    %7 = vector.extract_strided_slice %3 {offsets = [0, 1], sizes = [8, 255], strides = [1, 1]} : vector<8x256xf32> to vector<8x255xf32>
    %8 = vector.extract_strided_slice %3 {offsets = [0, 0], sizes = [8, 255], strides = [1, 1]} : vector<8x256xf32> to vector<8x255xf32>
    %9 = arith.subf %7, %8 : vector<8x255xf32>
    %c0_2 = arith.constant 0 : index
    %c0_3 = arith.constant 0 : index
    %10 = vector.load %arg3[%c0_2, %c0_3] : memref<1x256xf32, #tpu.memory_space<vmem>>, vector<1x256xf32>
    %11 = vector.extract_strided_slice %10 {offsets = [0, 0], sizes = [1, 255], strides = [1, 1]} : vector<1x256xf32> to vector<1x255xf32>
    %c0_4 = arith.constant 0 : index
    %c0_5 = arith.constant 0 : index
    %c0_6 = arith.constant 0 : index
    %12 = vector.load %arg4[%c0_4, %c0_5, %c0_6] : memref<1x1x1xf32, #tpu.memory_space<vmem>>, vector<1x1x1xf32>
    %13 = arith.mulf %6, %6 : vector<8x240xf32>
    %14 = vector.shape_cast %13 : vector<8x240xf32> to vector<1x8x240xf32>
    %cst = arith.constant dense<0.000000e+00> : vector<1xf32>
    %15 = vector.multi_reduction <add>, %14, %cst [1, 2] : vector<1x8x240xf32> to vector<1xf32>
    %16 = vector.shape_cast %15 : vector<1xf32> to vector<1x1x1xf32>
    %17 = vector.extract %16[0, 0, 0] : f32 from vector<1x1x1xf32>
    %18 = vector.broadcast %17 : f32 to vector<1x1x1xf32>
    %19 = arith.addf %12, %18 : vector<1x1x1xf32>
    %c0_7 = arith.constant 0 : index
    %c0_8 = arith.constant 0 : index
    %c0_9 = arith.constant 0 : index
    %20 = vector.load %arg4[%c0_7, %c0_8, %c0_9] : memref<1x1x1xf32, #tpu.memory_space<vmem>>, vector<1x1x1xf32>
    tpu.vector_store %arg4[%c0_7, %c0_8, %c0_9], %19 {strides = array<i32>} : memref<1x1x1xf32, #tpu.memory_space<vmem>>, vector<1x1x1xf32>,
    %c0_10 = arith.constant 0 : index
    %c0_11 = arith.constant 0 : index
    %c0_12 = arith.constant 0 : index
    %21 = vector.load %arg5[%c0_10, %c0_11, %c0_12] : memref<1x1x1xf32, #tpu.memory_space<vmem>>, vector<1x1x1xf32>
    %22 = arith.mulf %9, %9 : vector<8x255xf32>
    %23 = vector.broadcast %11 : vector<1x255xf32> to vector<8x255xf32>
    %24 = arith.mulf %22, %23 : vector<8x255xf32>
    %25 = vector.shape_cast %24 : vector<8x255xf32> to vector<1x8x255xf32>
    %cst_13 = arith.constant dense<0.000000e+00> : vector<1xf32>
    %26 = vector.multi_reduction <add>, %25, %cst_13 [1, 2] : vector<1x8x255xf32> to vector<1xf32>
    %27 = vector.shape_cast %26 : vector<1xf32> to vector<1x1x1xf32>
    %28 = vector.extract %27[0, 0, 0] : f32 from vector<1x1x1xf32>
    %29 = vector.broadcast %28 : f32 to vector<1x1x1xf32>
    %30 = arith.addf %21, %29 : vector<1x1x1xf32>
    %c0_14 = arith.constant 0 : index
    %c0_15 = arith.constant 0 : index
    %c0_16 = arith.constant 0 : index
    %31 = vector.load %arg5[%c0_14, %c0_15, %c0_16] : memref<1x1x1xf32, #tpu.memory_space<vmem>>, vector<1x1x1xf32>
    tpu.vector_store %arg5[%c0_14, %c0_15, %c0_16], %30 {strides = array<i32>} : memref<1x1x1xf32, #tpu.memory_space<vmem>>, vector<1x1x1xf32>,
    return
  }
  func.func @transform_0(%arg0: i32, %arg1: i32) -> (i32, i32) {
    %c1_i32 = arith.constant 1 : i32
    %0 = arith.muli %arg0, %c1_i32 : i32
    %1 = arith.addi %0, %arg1 : i32
    %c0_i32 = arith.constant 0 : i32
    %c0_i32_0 = arith.constant 0 : i32
    return %1, %c0_i32 : i32, i32
  }
  func.func @transform_1(%arg0: i32, %arg1: i32) -> (i32, i32) {
    %c0_i32 = arith.constant 0 : i32
    %c0_i32_0 = arith.constant 0 : i32
    %c0_i32_1 = arith.constant 0 : i32
    return %c0_i32, %c0_i32_0 : i32, i32
  }
  func.func @transform_2(%arg0: i32, %arg1: i32) -> (i32, i32, i32) {
    %c0_i32 = arith.constant 0 : i32
    %c0_i32_0 = arith.constant 0 : i32
    %c0_i32_1 = arith.constant 0 : i32
    return %arg0, %c0_i32, %c0_i32_0 : i32, i32, i32
  }
  func.func @transform_3(%arg0: i32, %arg1: i32) -> (i32, i32, i32) {
    %c0_i32 = arith.constant 0 : i32
    %c0_i32_0 = arith.constant 0 : i32
    %c0_i32_1 = arith.constant 0 : i32
    return %arg0, %c0_i32, %c0_i32_0 : i32, i32, i32
  }
}

</mosaic_0001>

<llo_original>
// kernel: tpu_custom_call.1
$region0: #{tpu_custom_call.1}
  #allocation0 [shape = 'u32[]', space=smem, size = 0x4, offset = 0x4, fixed_abs, tag = 'smem constant byte address 0x4 - core index']
  #allocation1 [shape = 'u32[144,128]{1,0:T(1,128)}', space=vmem, size = 0x12000, scoped, tag = 'internal scratch']
  %s0 = inlined_call_operand.hbm [shape: f32[16,256], index: 0, kind: input, shape index: {}]
  %s1 = inlined_call_operand.vmem [shape: f32[1,256], index: 1, kind: input, shape index: {}]
  %s2 = inlined_call_operand.vmem [shape: f32[2,1,1], index: 2, kind: output, shape index: {0}]
  %s3 = inlined_call_operand.vmem [shape: f32[2,1,1], index: 3, kind: output, shape index: {1}]
  %4 = xla_tuple %s2, %s3
  %s5 = sld [smem:[#allocation0]]
  $region57: #{tpu_custom_call.1} parent=0
    _
  %s7 = ssub.s32 1, %s5
  %s8 = scalar_select 0, %s7, %s5
  $region1: #{tpu_custom_call.1} parent=0
    #allocation2 [shape = 'u8[16384]{0}', space=vmem, size = 0x4000, scoped, tag = 'input window, operand 0']
    #allocation3 [shape = 's32[2]{0}', space=sflag, size = 0x8, scoped, tag = 'scoped memory for tpu_custom_call.1']
    %9 = vsyncpa [#allocation3], 0
    %s10 = scalar_lea.sflag [#allocation3], 1
    %11 = vsyncpa %s10, 0
    loop: start=0, step=1, limit=4
    $region2: #{tpu_custom_call.1} parent=1 // loop_pre_header
      _
    $region3: #{tpu_custom_call.1} parent=1 // loop_header
      %s13 = sphi 0, %s17
      %p14 = scmp.ge.s32.totalorder %s13, 4
      %s20 = sphi 0, %s32
      %s21 = sphi 0, %s28
      %s22 = sphi 0, %s20
      %s23 = sphi 0, %s21
      %s24 = sphi 0, %s22
      %s25 = sphi 0, %s23
      %s37 = sphi 0, %s39
      %s40 = sphi 0, %s37
      %s41 = sphi 0, %s40
      %s57 = sphi 0, %s41
      %s61 = sphi 0, %s61
      %s63 = sphi 0, %s61
      %s64 = sphi 0, %s63
      %s78 = sphi 0, %s64
      %s84 = sphi 0, %s86
      %s87 = sphi 0, %s84
      %s88 = sphi 0, %s87
      %s104 = sphi 0, %s88
      %s110 = sphi 0, %s112
      %s113 = sphi 0, %s110
      %s114 = sphi 0, %s113
      %s130 = sphi 0, %s114
    $region4: #{tpu_custom_call.1} parent=1 // loop_header_branch
      %16 = sbr.rel (%p14) target = $region8
    $region5: #{tpu_custom_call.1} parent=1 // loop_body
      %s18 = ssub.s32 %s13, 1
      %s19 = ssub.s32 %s13, 2
      %s26 = sadd.s32 1, %s21
      %p27 = scmp.ge.s32.totalorder %s26, 1
      %s28 = scalar_select %p27, 0, %s26
      %s29 = sadd.s32 1, %s20
      %s30 = scalar_select %p27, %s29, %s20
      %p31 = scmp.ge.s32.totalorder %s30, 2
      %s32 = scalar_select %p31, 0, %s30
      %s33 = sadd.s32 %s20, %s21
      %s34 = sadd.s32 %s32, %s28
      %s35 = ssub.s32 %s33, %s34
      %p36 = scmp.eq.s32.totalorder %s35, 0
      %s38 = sadd.s32 %s37, 1
      %s39 = scalar_select %p36, %s37, %s38
      %p42 = pneg %p36
      %p43 = scmp.eq.s32.totalorder %s13, 1
      %p44 = por %p42, %p43
      %p45 = scmp.ne.s32.totalorder %s37, %s40
      %p46 = scmp.eq.s32.totalorder %s13, 0
      %p47 = por %p45, %p46
      %p48 = scmp.ne.s32.totalorder %s37, %s40
      %p49 = scmp.eq.s32.totalorder %s18, 1
      %p50 = por %p48, %p49
      %p51 = scmp.ne.s32.totalorder %s40, %s41
      %p52 = scmp.eq.s32.totalorder %s18, 0
      %p53 = por %p51, %p52
      %p54 = scmp.ne.s32.totalorder %s40, %s41
      %p55 = scmp.eq.s32.totalorder %s19, 1
      %p56 = por %p54, %p55
      %p58 = scmp.ne.s32.totalorder %s41, %s57
      %p59 = scmp.eq.s32.totalorder %s19, 0
      %p60 = por %p58, %p59
      %s62 = sadd.s32 %s61, 1
      %p65 = scmp.eq.s32.totalorder %s13, 1
      %p66 = scmp.ne.s32.totalorder %s61, %s63
      %p67 = scmp.eq.s32.totalorder %s13, 0
      %p68 = por %p66, %p67
      %p69 = scmp.ne.s32.totalorder %s61, %s63
      %p70 = scmp.eq.s32.totalorder %s18, 1
      %p71 = por %p69, %p70
      %p72 = scmp.ne.s32.totalorder %s63, %s64
      %p73 = scmp.eq.s32.totalorder %s18, 0
      %p74 = por %p72, %p73
      %p75 = scmp.ne.s32.totalorder %s63, %s64
      %p76 = scmp.eq.s32.totalorder %s19, 1
      %p77 = por %p75, %p76
      %p79 = scmp.ne.s32.totalorder %s64, %s78
      %p80 = scmp.eq.s32.totalorder %s19, 0
      %p81 = por %p79, %p80
      %s82 = ssub.s32 %s20, %s32
      %p83 = scmp.eq.s32.totalorder %s82, 0
      %s85 = sadd.s32 %s84, 1
      %s86 = scalar_select %p83, %s84, %s85
      %p89 = pneg %p83
      %p90 = scmp.eq.s32.totalorder %s13, 1
      %p91 = por %p89, %p90
      %p92 = scmp.ne.s32.totalorder %s84, %s87
      %p93 = scmp.eq.s32.totalorder %s13, 0
      %p94 = por %p92, %p93
      %p95 = scmp.ne.s32.totalorder %s84, %s87
      %p96 = scmp.eq.s32.totalorder %s18, 1
      %p97 = por %p95, %p96
      %p98 = scmp.ne.s32.totalorder %s87, %s88
      %p99 = scmp.eq.s32.totalorder %s18, 0
      %p100 = por %p98, %p99
      %p101 = scmp.ne.s32.totalorder %s87, %s88
      %p102 = scmp.eq.s32.totalorder %s19, 1
      %p103 = por %p101, %p102
      %p105 = scmp.ne.s32.totalorder %s88, %s104
      %p106 = scmp.eq.s32.totalorder %s19, 0
      %p107 = por %p105, %p106
      %s108 = ssub.s32 %s20, %s32
      %p109 = scmp.eq.s32.totalorder %s108, 0
      %s111 = sadd.s32 %s110, 1
      %s112 = scalar_select %p109, %s110, %s111
      %p115 = pneg %p109
      %p116 = scmp.eq.s32.totalorder %s13, 1
      %p117 = por %p115, %p116
      %p118 = scmp.ne.s32.totalorder %s110, %s113
      %p119 = scmp.eq.s32.totalorder %s13, 0
      %p120 = por %p118, %p119
      %p121 = scmp.ne.s32.totalorder %s110, %s113
      %p122 = scmp.eq.s32.totalorder %s18, 1
      %p123 = por %p121, %p122
      %p124 = scmp.ne.s32.totalorder %s113, %s114
      %p125 = scmp.eq.s32.totalorder %s18, 0
      %p126 = por %p124, %p125
      %p127 = scmp.ne.s32.totalorder %s113, %s114
      %p128 = scmp.eq.s32.totalorder %s19, 1
      %p129 = por %p127, %p128
      %p131 = scmp.ne.s32.totalorder %s114, %s130
      %p132 = scmp.eq.s32.totalorder %s19, 0
      %p133 = por %p131, %p132
      %p134 = scmp.le.s32.totalorder 1, %s13
      %p135 = scmp.lt.s32.totalorder %s13, 3
      %p136 = pnand %p134, %p135
      %p137 = pneg %p136
      // Predicated region
      $region9: #{tpu_custom_call.1} parent=5 // pred_check
        _
      $region10: #{tpu_custom_call.1} parent=5 // pred_check_branch
        %139 = sbr.rel (%p136) target = $region12
      $region11: #{tpu_custom_call.1} parent=5 // pred_region
        %s140 = ssub.s32 %s13, 1
        // Predicated region
        $region13: #{tpu_custom_call.1} parent=11 // pred_check
          %p141 = pneg %p74
        $region14: #{tpu_custom_call.1} parent=11 // pred_check_branch
          %143 = sbr.rel (%p141) target = $region16
        $region15: #{tpu_custom_call.1} parent=11 // pred_region
          _
        $region16: #{tpu_custom_call.1} parent=11 // pred_fallthru
          _
      $region12: #{tpu_custom_call.1} parent=5 // pred_fallthru
        _
      %p144 = scmp.lt.s32.totalorder %s13, 2
      // Predicated region
      $region17: #{tpu_custom_call.1} parent=5 // pred_check
        %p145 = pneg %p144
      $region18: #{tpu_custom_call.1} parent=5 // pred_check_branch
        %147 = sbr.rel (%p145) target = $region20
      $region19: #{tpu_custom_call.1} parent=5 // pred_region
        // Predicated region
        $region21: #{tpu_custom_call.1} parent=19 // pred_check
          %p148 = pneg %p47
        $region22: #{tpu_custom_call.1} parent=19 // pred_check_branch
          %150 = sbr.rel (%p148) target = $region24
        $region23: #{tpu_custom_call.1} parent=19 // pred_region
          %s151 = sand.u32 %s37, 1
          %s152 = scalar_lea.sflag [#allocation3], %s151
          %s153 = sand.u32 %s37, 1
          %s154 = smul.addr %s153, 16
          %s155 = scalar_lea.vmem [#allocation2], %s154
          %s156 = sadd.s32 %s20, %s21
          %s158 = ssub.s32 256, 256
          %159 = vsyncadd %s152, %s158
          %s160 = smul.addr %s156, 2
          %s161 = smul.addr %s160, 128
          %s162 = scalar_lea.hbm %s0, %s161
          %s164 = sshll.u32 %s155, 4
          %s165 = int_to_ptr.vmem [resolvable:$true] %s164
          %167 = dma.hbm_to_vmem [thread:$0]  %s162, 256, %s165, %s152
        $region24: #{tpu_custom_call.1} parent=19 // pred_fallthru
          _
      $region20: #{tpu_custom_call.1} parent=5 // pred_fallthru
        _
      %p168 = scmp.le.s32.totalorder 1, %s13
      %p169 = scmp.lt.s32.totalorder %s13, 3
      %p170 = pnand %p168, %p169
      %p171 = pneg %p170
      // Predicated region
      $region25: #{tpu_custom_call.1} parent=5 // pred_check
        _
      $region26: #{tpu_custom_call.1} parent=5 // pred_check_branch
        %173 = sbr.rel (%p170) target = $region28
      $region27: #{tpu_custom_call.1} parent=5 // pred_region
        %s174 = ssub.s32 %s13, 1
        %s175 = sand.u32 %s40, 1
        %s176 = scalar_lea.sflag [#allocation3], %s175
        %s177 = sand.u32 %s40, 1
        %s178 = smul.addr %s177, 16
        %s179 = scalar_lea.vmem [#allocation2], %s178
        // Predicated region
        $region29: #{tpu_custom_call.1} parent=27 // pred_check
          %p180 = pneg %p53
        $region30: #{tpu_custom_call.1} parent=27 // pred_check_branch
          %182 = sbr.rel (%p180) target = $region32
        $region31: #{tpu_custom_call.1} parent=27 // pred_region
          %183 = dma.done %s176, 256
        $region32: #{tpu_custom_call.1} parent=27 // pred_fallthru
          _
        %s184 = sand.u32 %s40, 1
        %s185 = scalar_lea.sflag [#allocation3], %s184
        %s186 = sand.u32 %s40, 1
        %s187 = smul.addr %s186, 16
        %s188 = scalar_lea.vmem [#allocation2], %s187
        %p189 = pneg %p53
        %p190 = pneg %p50
        %p191 = pneg %p74
        %p192 = pneg %p71
        %p193 = pneg %p100
        %p194 = pneg %p97
        %p195 = scmp.lt.s32.totalorder %s22, 1
        %s196 = scalar_select %p195, %s22, 1
        %s197 = scalar_lea.vmem %s2, %s196
        %p198 = pneg %p126
        %p199 = pneg %p123
        %p200 = scmp.lt.s32.totalorder %s22, 1
        %s201 = scalar_select %p200, %s22, 1
        %s202 = scalar_lea.vmem %s3, %s201
        %s203 = sadd.s32 %s22, %s23
        %p204 = scmp.lt.s32.totalorder %s22, 1
        %s205 = scalar_select %p204, %s22, 1
        %s206 = scalar_lea.vmem %s2, %s205
        %p207 = scmp.lt.s32.totalorder %s22, 1
        %s208 = scalar_select %p207, %s22, 1
        %s209 = scalar_lea.vmem %s3, %s208
        %p210 = scmp.eq.s32.totalorder %s23, 0
        // Predicated region
        $region33: #{tpu_custom_call.1} parent=27 // pred_check
          %p211 = pneg %p210
        $region34: #{tpu_custom_call.1} parent=27 // pred_check_branch
          %213 = sbr.rel (%p211) target = $region36
        $region35: #{tpu_custom_call.1} parent=27 // pred_region
          %vm214 = vcmask 0
          %215 = vst.msk [vmem:[%s206] sm:$0x1] %vm214, 0.0
          %216 = vst.msk [vmem:[%s209] sm:$0x1] %vm214, 0.0
        $region36: #{tpu_custom_call.1} parent=27 // pred_fallthru
          _
        %v217 = vld [vmem:[%s179] sm:$0xff]
        %v218 = vld [vmem:[%s179 + $0x8] sm:$0xff]
        %221 = vrot.lane.b32.xlu0 %v217, 16
        %v222 = vpop.permute.xlu0 %221
        %223 = vrot.lane.b32.xlu0 %v218, 16
        %v224 = vpop.permute.xlu0 %223
        %vm225 = vcmask 130048
        %v226 = vsel %vm225, %v222, %v224
        %v229 = vsub.f32 %v217, %v222
        %v230 = vsub.f32 %v218, %v226
        %231 = vrot.lane.b32.xlu0 %v217, 1
        %v232 = vpop.permute.xlu0 %231
        %233 = vrot.lane.b32.xlu0 %v218, 1
        %v234 = vpop.permute.xlu0 %233
        %vm235 = vcmask 7168
        %v236 = vsel %vm235, %v232, %v234
        %v239 = vsub.f32 %v217, %v232
        %v240 = vsub.f32 %v218, %v236
        %v241 = vld [vmem:[%s1] sm:$0x3]
        %v242 = vld [vmem:[%s206] sm:$0x1]
        %v243 = vmul.f32 %v229, %v229
        %v244 = vmul.f32 %v230, %v230
        %247 = vrot.lane.b32.xlu0 %v243, 112
        %v248 = vpop.permute.xlu0 %247
        %249 = vrot.lane.b32.xlu0 %v244, 112
        %v250 = vpop.permute.xlu0 %249
        %vm251 = vcmask 916480
        %v252 = vsel %vm251, %v248, %v250
        %v255 = vsel %vm251, %v250, 0.0
        %v256 = vadd.f32 %v252, %v255
        %257 = vadd.xlane.f32.xlu0 %v256
        %v258 = vpop.xlane.xlu0 %257
        %v259 = vrot.slane %v258, 4
        %v260 = vadd.f32 %v258, %v259
        %v261 = vrot.slane %v260, 2
        %v262 = vadd.f32 %v260, %v261
        %v263 = vrot.slane %v262, 1
        %v264 = vadd.f32 %v262, %v263
        %s265 = vtos %v264
        %v266 = vstv %s265
        %v267 = vadd.f32 %v242, %v266
        %vm268 = vcmask 0
        %269 = vst.msk [vmem:[%s206] sm:$0x1] %vm268, %v267
        %v270 = vld [vmem:[%s209] sm:$0x1]
        %v271 = vmul.f32 %v239, %v239
        %v272 = vmul.f32 %v240, %v240
        %v274 = vlaneseq
        %v275 = vshrl.u32 %v274, 7
        %v276 = vsub.s32 0, %v275
        %v277 = vrot.slane %v241, %v276
        %v278 = vlaneseq
        %v279 = vshrl.u32 %v278, 7
        %v280 = vsub.s32 1, %v279
        %v281 = vrot.slane %v241, %v280
        %282 = vrot.lane.b32.xlu0 %v277, 1
        %v283 = vpop.permute.xlu0 %282
        %284 = vrot.lane.b32.xlu0 %v281, 1
        %v285 = vpop.permute.xlu0 %284
        %v286 = vsel %vm235, %v283, %v285
        %v289 = vmul.f32 %v271, %v283
        %v290 = vmul.f32 %v272, %v286
        %293 = vrot.lane.b32.xlu0 %v289, 127
        %v294 = vpop.permute.xlu0 %293
        %295 = vrot.lane.b32.xlu0 %v290, 127
        %v296 = vpop.permute.xlu0 %295
        %vm297 = vcmask 1039360
        %v298 = vsel %vm297, %v294, %v296
        %v301 = vsel %vm297, %v296, 0.0
        %v302 = vadd.f32 %v298, %v301
        %303 = vadd.xlane.f32.xlu0 %v302
        %v304 = vpop.xlane.xlu0 %303
        %v305 = vrot.slane %v304, 4
        %v306 = vadd.f32 %v304, %v305
        %v307 = vrot.slane %v306, 2
        %v308 = vadd.f32 %v306, %v307
        %v309 = vrot.slane %v308, 1
        %v310 = vadd.f32 %v308, %v309
        %s311 = vtos %v310
        %v312 = vstv %s311
        %v313 = vadd.f32 %v270, %v312
        %314 = vst.msk [vmem:[%s209] sm:$0x1] %vm268, %v313
        %p315 = scmp.lt.s32.totalorder %s22, 1
        %s316 = scalar_select %p315, %s22, 1
        %s317 = scalar_lea.vmem %s2, %s316
        %p318 = scmp.lt.s32.totalorder %s22, 1
        %s319 = scalar_select %p318, %s22, 1
        %s320 = scalar_lea.vmem %s3, %s319
        // Predicated region
        $region37: #{tpu_custom_call.1} parent=27 // pred_check
          %p321 = pneg %p97
        $region38: #{tpu_custom_call.1} parent=27 // pred_check_branch
          %323 = sbr.rel (%p321) target = $region40
        $region39: #{tpu_custom_call.1} parent=27 // pred_region
          _
        $region40: #{tpu_custom_call.1} parent=27 // pred_fallthru
          _
        // Predicated region
        $region41: #{tpu_custom_call.1} parent=27 // pred_check
          %p324 = pneg %p123
        $region42: #{tpu_custom_call.1} parent=27 // pred_check_branch
          %326 = sbr.rel (%p324) target = $region44
        $region43: #{tpu_custom_call.1} parent=27 // pred_region
          _
        $region44: #{tpu_custom_call.1} parent=27 // pred_fallthru
          _
      $region28: #{tpu_custom_call.1} parent=5 // pred_fallthru
        _
      %p327 = scmp.le.s32.totalorder 2, %s13
      // Predicated region
      $region45: #{tpu_custom_call.1} parent=5 // pred_check
        %p328 = pneg %p327
      $region46: #{tpu_custom_call.1} parent=5 // pred_check_branch
        %330 = sbr.rel (%p328) target = $region48
      $region47: #{tpu_custom_call.1} parent=5 // pred_region
        %s331 = ssub.s32 %s13, 2
        // Predicated region
        $region49: #{tpu_custom_call.1} parent=47 // pred_check
          %p332 = pneg %p103
        $region50: #{tpu_custom_call.1} parent=47 // pred_check_branch
          %334 = sbr.rel (%p332) target = $region52
        $region51: #{tpu_custom_call.1} parent=47 // pred_region
          %p335 = scmp.lt.s32.totalorder %s24, 1
          %s336 = scalar_select %p335, %s24, 1
          %s337 = scalar_lea.vmem %s2, %s336
        $region52: #{tpu_custom_call.1} parent=47 // pred_fallthru
          _
        // Predicated region
        $region53: #{tpu_custom_call.1} parent=47 // pred_check
          %p338 = pneg %p129
        $region54: #{tpu_custom_call.1} parent=47 // pred_check_branch
          %340 = sbr.rel (%p338) target = $region56
        $region55: #{tpu_custom_call.1} parent=47 // pred_region
          %p341 = scmp.lt.s32.totalorder %s24, 1
          %s342 = scalar_select %p341, %s24, 1
          %s343 = scalar_lea.vmem %s3, %s342
        $region56: #{tpu_custom_call.1} parent=47 // pred_fallthru
          _
      $region48: #{tpu_custom_call.1} parent=5 // pred_fallthru
        _
    $region6: #{tpu_custom_call.1} parent=1 // loop_footer
      %s17 = sadd.s32 1, %s13
    $region7: #{tpu_custom_call.1} parent=1 // loop_footer_branch
      %12 = sbr.rel target = $region3
    $region8: #{tpu_custom_call.1} parent=1 // loop_exit
      _
    %344 = vsyncpa [#allocation3], 1
    %s345 = scalar_lea.sflag [#allocation3], 1
    %346 = vsyncpa %s345, 1

</llo_original>
